<compile_context>
chip_gen: v7x
topology: tpu7x:2x2x1
jax: 0.10.0
libtpu: 0.0.40
codegen_flags: <defaults>
</compile_context>

<pallas_src>
import functools

import jax
import jax.numpy as jnp
from jax.experimental import pallas as pl
from jax.experimental.pallas import tpu as pltpu


LEAKY_SLOPE = 0.01   # nn.LeakyReLU() default negative_slope
BN_EPS = 1e-5        # nn.BatchNorm1d default eps
_MXU_MIN_K = 8       # below this, layer 1 runs as VPU broadcast FMAs


def _leaky_relu(x):
    # max(x, a*x) == LeakyReLU(x) for 0 < a < 1; 2 VALU ops/elt vs 3 for where().
    return jnp.maximum(x, LEAKY_SLOPE * x)


def _discriminator_kernel(nin, z_ref, w2t_ref, aux_ref, out_ref):
    """One batch tile, fully transposed: features on sublanes, batch on lanes.

    z_ref   : (nin, TB)       input latents, transposed, f32
    w2t_ref : (nh, nh)        BN-folded W2, transposed (f32 or bf16, resident)
    aux_ref : (nh, nin + 4)   packed [ W1^T | b1 | b2' | w3 | b3 ], f32
    out_ref : (1, TB)         sigmoid probabilities (lane-dense), f32
    """
    zt = z_ref[...]                               # (nin, TB)
    b1 = aux_ref[:, nin:nin + 1]                  # (nh, 1)
    b2 = aux_ref[:, nin + 1:nin + 2]              # (nh, 1)  (BN folded in)
    w3 = aux_ref[:, nin + 2:nin + 3]              # (nh, 1)
    b3 = aux_ref[0:1, nin + 3:nin + 4]            # (1, 1)

    # ---- layer 1: Linear(nin -> nh) + LeakyReLU --------------------------
    if nin < _MXU_MIN_K:
        # K tiny (nin=2): broadcast FMAs instead of a zero-padded MXU pass.
        h = b1 + aux_ref[:, 0:1] * zt[0:1, :]     # (nh, TB)
        for k in range(1, nin):
            h = h + aux_ref[:, k:k + 1] * zt[k:k + 1, :]
    else:
        h = jnp.dot(aux_ref[:, 0:nin], zt,
                    preferred_element_type=jnp.float32) + b1
    h = _leaky_relu(h)

    # ---- layer 2: Linear(nh -> nh) [BatchNorm folded] + LeakyReLU --------
    # MXU inputs follow w2t's dtype (bf16 when enabled); accumulation is f32.
    h = jnp.dot(w2t_ref[...], h.astype(w2t_ref.dtype),
                preferred_element_type=jnp.float32) + b2
    h = _leaky_relu(h)
    # Dropout(p=0.2) is identity at inference time.

    # ---- layer 3: Linear(nh -> 1) + Sigmoid -------------------------------
    # 1-wide output: VPU multiply + XLU sublane reduction, result lands
    # directly in the lane-dense (1, TB) output layout.
    p = jnp.sum(w3 * h, axis=0, keepdims=True) + b3    # (1, TB)
    out_ref[...] = jax.nn.sigmoid(p)


def prepare_params(params, mxu_bf16=None):
    """One-time host-side parameter prep.

    Folds eval-mode BatchNorm into W2/b2 and packs all small per-feature
    vectors into a single aux array so the kernel needs only 3 input DMAs.
    `mxu_bf16=None` -> auto: bf16 weights for the MXU once nh >= 512
    (marginal below that; f32 keeps bit-tight parity at small nh).
    """
    w1, b1 = params["w1"], params["b1"]            # (nin, nh), (1, nh)
    w2, b2 = params["w2"], params["b2"]            # (nh, nh),  (1, nh)
    w3, b3 = params["w3"], params["b3"]            # (nh, 1),   (1, 1)

    scale = params["gamma"] * jax.lax.rsqrt(params["var"] + BN_EPS)   # (1, nh)
    w2f = w2 * scale                                # per-output-column scale
    b2f = (b2 - params["mean"]) * scale + params["beta"]

    nin, nh = w1.shape
    if mxu_bf16 is None:
        mxu_bf16 = nh >= 512
    w2_dtype = jnp.bfloat16 if mxu_bf16 else jnp.float32

    aux = jnp.concatenate(
        [w1.T,                                      # (nh, nin)
         b1.T,                                      # (nh, 1)
         b2f.T,                                     # (nh, 1)
         w3,                                        # (nh, 1)
         jnp.broadcast_to(b3, (nh, 1))],            # (nh, 1)
        axis=1).astype(jnp.float32)                 # (nh, nin + 4)

    return {"w2t": w2f.T.astype(w2_dtype), "aux": aux}


def _pick_tb(batch):
    """Batch tile: multiple of 256, in [256, 2048], >= 2 grid steps if B > 256.

    >= 2 steps lets the "parallel" batch axis shard across v7x's 2 TensorCores;
    the 2048 cap keeps per-step VMEM tiny while amortizing step overhead.
    """
    b256 = pl.cdiv(batch, 256) * 256
    if b256 <= 256:
        return 256
    tb = pl.cdiv(pl.cdiv(b256, 4), 256) * 256       # aim for ~4 steps
    tb = min(max(tb, 256), 2048)
    if pl.cdiv(b256, tb) < 2:                        # guarantee >= 2 steps
        tb = pl.cdiv(pl.cdiv(b256, 2), 256) * 256
    return tb


@functools.partial(jax.jit, static_argnames=("tb",))
def discriminator_forward(z, w2t, aux, tb=None):
    """Returns lane-major probabilities of shape (1, b_pad); caller slices/reshapes."""
    B, nin = z.shape
    nh = w2t.shape[0]
    assert aux.shape == (nh, nin + 4)

    if tb is None:
        tb = _pick_tb(B)
    grid_b = pl.cdiv(B, tb)
    b_pad = grid_b * tb

    # pad + cast + transpose is one tiny XLA copy; negligible next to the call.
    zt = z.astype(jnp.float32).T                    # (nin, B): batch on lanes
    if b_pad != B:
        zt = jnp.pad(zt, ((0, 0), (0, b_pad - B)))

    kernel = functools.partial(_discriminator_kernel, nin)

    cost = pl.CostEstimate(
        flops=2 * b_pad * nh * (nin + nh + 1),
        transcendentals=b_pad,                      # sigmoid
        bytes_accessed=(zt.size * 4 + w2t.size * w2t.dtype.itemsize
                        + aux.size * 4 + b_pad * 4))

    # Grid-invariant inputs: single-buffer them once they are big enough for
    # the extra buffer to matter (v7x has only 64 MiB VMEM per TC).
    resident_kw = {"pipeline_mode": pl.Buffered(1)} if nh >= 512 else {}

    out_t = pl.pallas_call(
        kernel,
        out_shape=jax.ShapeDtypeStruct((1, b_pad), jnp.float32),
        grid=(grid_b,),
        in_specs=[
            pl.BlockSpec((nin, tb), lambda i: (0, i)),                      # z^T tile
            pl.BlockSpec((nh, nh), lambda i: (0, 0), **resident_kw),        # W2'^T
            pl.BlockSpec((nh, nin + 4), lambda i: (0, 0), **resident_kw),   # aux
        ],
        out_specs=pl.BlockSpec((1, tb), lambda i: (0, i)),   # lane-dense output
        compiler_params=pltpu.CompilerParams(
            dimension_semantics=("parallel",),
            vmem_limit_bytes=32 * 1024 * 1024),
        cost_estimate=cost,
    )(zt, w2t, aux)

    return out_t                                    # (1, b_pad)


def init_params(key, nin, nh):
    """Deterministic init mimicking PyTorch Linear default (U[-1/sqrt(fan_in), +])."""
    ks = jax.random.split(key, 6)

    def lin(kw, kb, fan_in, fan_out):
        bound = 1.0 / jnp.sqrt(jnp.float32(fan_in))
        w = jax.random.uniform(kw, (fan_in, fan_out), jnp.float32, -bound, bound)
        b = jax.random.uniform(kb, (1, fan_out), jnp.float32, -bound, bound)
        return w, b

    w1, b1 = lin(ks[0], ks[1], nin, nh)
    w2, b2 = lin(ks[2], ks[3], nh, nh)
    w3, b3 = lin(ks[4], ks[5], nh, 1)

    return {
        "w1": w1, "b1": b1,
        "w2": w2, "b2": b2,
        # BatchNorm1d default init: weight=1, bias=0, running_mean=0, running_var=1
        "gamma": jnp.ones((1, nh), jnp.float32),
        "beta": jnp.zeros((1, nh), jnp.float32),
        "mean": jnp.zeros((1, nh), jnp.float32),
        "var": jnp.ones((1, nh), jnp.float32),
        "w3": w3, "b3": b3,
    }


def reference_forward(z, p):
    """Pure-JAX reference of the same forward pass (for a sanity check)."""
    h = jnp.dot(z, p["w1"]) + p["b1"]
    h = jnp.where(h >= 0, h, LEAKY_SLOPE * h)
    h = jnp.dot(h, p["w2"]) + p["b2"]
    h = (h - p["mean"]) * (p["gamma"] / jnp.sqrt(p["var"] + BN_EPS)) + p["beta"]
    h = jnp.where(h >= 0, h, LEAKY_SLOPE * h)
    out = jnp.dot(h, p["w3"]) + p["b3"]
    return jax.nn.sigmoid(out)


if __name__ == "__main__":
    # Small shapes: latent dim 2 (Discriminator default nin), lane-aligned
    # hidden width 128, batch 512 -> two 256-wide batch tiles (multi-step grid).
    B, NIN, NH = 512, 2, 128

    key = jax.random.PRNGKey(0)
    kz, kp = jax.random.split(key)
    z = jax.random.normal(kz, (B, NIN), jnp.float32)
    params = init_params(kp, NIN, NH)

    prep = prepare_params(params)                   # f32 MXU weights at nh=128
    out_lane = discriminator_forward(z, prep["w2t"], prep["aux"])
    out_lane = jax.block_until_ready(out_lane)

    # Torch-layout (B, 1) view produced outside the jitted hot path.
    p = out_lane[0, :B].reshape(B, 1)

    ref = reference_forward(z, params)
    assert p.shape == (B, 1)
    # f32 path: tight tolerance (MXU reduced-precision passes + reduction order).
    # bf16 MXU path (nh >= 512) would need ~1e-2 relative on pre-sigmoid logits.
    tol = 1e-4 if prep["w2t"].dtype == jnp.float32 else 2e-2
    assert jnp.allclose(p, ref, atol=tol, rtol=tol), "mismatch vs JAX reference"

    print("KERNEL_OK")
</pallas_src>

<mosaic_0001>
module attributes {stable_mosaic.version = 11 : i64} {
  func.func @_discriminator_kernel(%arg0: i32, %arg1: memref<2x256xf32, #tpu.memory_space<vmem>>, %arg2: memref<128x128xf32, #tpu.memory_space<vmem>>, %arg3: memref<128x6xf32, #tpu.memory_space<vmem>>, %arg4: memref<1x256xf32, #tpu.memory_space<vmem>>) attributes {dimension_semantics = [#tpu.dimension_semantics<parallel>], iteration_bounds = array<i64: 2>, scalar_prefetch = 0 : i64, scratch_operands = 0 : i64, tpu.core_type = #tpu.core_type<tc>, window_params = [{transform_indices = @transform_0, window_bounds = array<i64: 2, 256>}, {pipeline_mode = #tpu.pipeline_mode<synchronous>, transform_indices = @transform_1, window_bounds = array<i64: 128, 128>}, {pipeline_mode = #tpu.pipeline_mode<synchronous>, transform_indices = @transform_2, window_bounds = array<i64: 128, 6>}, {transform_indices = @transform_3, window_bounds = array<i64: 1, 256>}]} {
    %c0 = arith.constant 0 : index
    %c0_0 = arith.constant 0 : index
    %0 = vector.load %arg1[%c0, %c0_0] : memref<2x256xf32, #tpu.memory_space<vmem>>, vector<2x256xf32>
    %c0_1 = arith.constant 0 : index
    %c2 = arith.constant 2 : index
    %1 = vector.load %arg3[%c0_1, %c2] : memref<128x6xf32, #tpu.memory_space<vmem>>, vector<128x1xf32>
    %c0_2 = arith.constant 0 : index
    %c3 = arith.constant 3 : index
    %2 = vector.load %arg3[%c0_2, %c3] : memref<128x6xf32, #tpu.memory_space<vmem>>, vector<128x1xf32>
    %c0_3 = arith.constant 0 : index
    %c4 = arith.constant 4 : index
    %3 = vector.load %arg3[%c0_3, %c4] : memref<128x6xf32, #tpu.memory_space<vmem>>, vector<128x1xf32>
    %c0_4 = arith.constant 0 : index
    %c5 = arith.constant 5 : index
    %4 = vector.load %arg3[%c0_4, %c5] : memref<128x6xf32, #tpu.memory_space<vmem>>, vector<1x1xf32>
    %c0_5 = arith.constant 0 : index
    %c0_6 = arith.constant 0 : index
    %5 = vector.load %arg3[%c0_5, %c0_6] : memref<128x6xf32, #tpu.memory_space<vmem>>, vector<128x1xf32>
    %6 = vector.extract_strided_slice %0 {offsets = [0, 0], sizes = [1, 256], strides = [1, 1]} : vector<2x256xf32> to vector<1x256xf32>
    %7 = vector.broadcast %5 : vector<128x1xf32> to vector<128x256xf32>
    %8 = vector.broadcast %6 : vector<1x256xf32> to vector<128x256xf32>
    %9 = arith.mulf %7, %8 : vector<128x256xf32>
    %10 = vector.broadcast %1 : vector<128x1xf32> to vector<128x256xf32>
    %11 = arith.addf %10, %9 : vector<128x256xf32>
    %c0_7 = arith.constant 0 : index
    %c1 = arith.constant 1 : index
    %12 = vector.load %arg3[%c0_7, %c1] : memref<128x6xf32, #tpu.memory_space<vmem>>, vector<128x1xf32>
    %13 = vector.extract_strided_slice %0 {offsets = [1, 0], sizes = [1, 256], strides = [1, 1]} : vector<2x256xf32> to vector<1x256xf32>
    %14 = vector.broadcast %12 : vector<128x1xf32> to vector<128x256xf32>
    %15 = vector.broadcast %13 : vector<1x256xf32> to vector<128x256xf32>
    %16 = arith.mulf %14, %15 : vector<128x256xf32>
    %17 = arith.addf %11, %16 : vector<128x256xf32>
    %cst = arith.constant 0.00999999977 : f32
    %18 = vector.broadcast %cst : f32 to vector<128x256xf32>
    %19 = arith.mulf %18, %17 : vector<128x256xf32>
    %20 = arith.maximumf %17, %19 : vector<128x256xf32>
    %c0_8 = arith.constant 0 : index
    %c0_9 = arith.constant 0 : index
    %21 = vector.load %arg2[%c0_8, %c0_9] : memref<128x128xf32, #tpu.memory_space<vmem>>, vector<128x128xf32>
    %cst_10 = arith.constant dense<0.000000e+00> : vector<128x256xf32>
    %22 = tpu.matmul %21, %20, %cst_10 {dimension_numbers = #tpu.dot_dimension_numbers<[1], [0], [0], [1], [0, 0, 1, 1], [], []>} : vector<128x128xf32>, vector<128x256xf32>, vector<128x256xf32> -> vector<128x256xf32>
    %23 = vector.broadcast %2 : vector<128x1xf32> to vector<128x256xf32>
    %24 = arith.addf %22, %23 : vector<128x256xf32>
    %cst_11 = arith.constant 0.00999999977 : f32
    %25 = vector.broadcast %cst_11 : f32 to vector<128x256xf32>
    %26 = arith.mulf %25, %24 : vector<128x256xf32>
    %27 = arith.maximumf %24, %26 : vector<128x256xf32>
    %28 = vector.broadcast %3 : vector<128x1xf32> to vector<128x256xf32>
    %29 = arith.mulf %28, %27 : vector<128x256xf32>
    %cst_12 = arith.constant dense<0.000000e+00> : vector<256xf32>
    %30 = vector.multi_reduction <add>, %29, %cst_12 [0] : vector<128x256xf32> to vector<256xf32>
    %31 = vector.shape_cast %30 : vector<256xf32> to vector<1x256xf32>
    %32 = vector.broadcast %4 : vector<1x1xf32> to vector<1x256xf32>
    %33 = arith.addf %31, %32 : vector<1x256xf32>
    %34 = arith.negf %33 : vector<1x256xf32>
    %35 = math.exp %34 : vector<1x256xf32>
    %cst_13 = arith.constant 1.000000e+00 : f32
    %36 = vector.broadcast %cst_13 : f32 to vector<1x256xf32>
    %37 = arith.addf %36, %35 : vector<1x256xf32>
    %38 = arith.divf %36, %37 : vector<1x256xf32>
    %c0_14 = arith.constant 0 : index
    %c0_15 = arith.constant 0 : index
    %39 = vector.load %arg4[%c0_14, %c0_15] : memref<1x256xf32, #tpu.memory_space<vmem>>, vector<1x256xf32>
    tpu.vector_store %arg4[%c0_14, %c0_15], %38 {strides = array<i32>} : memref<1x256xf32, #tpu.memory_space<vmem>>, vector<1x256xf32>,
    return
  }
  func.func @transform_0(%arg0: i32) -> (i32, i32) {
    %c0_i32 = arith.constant 0 : i32
    %c0_i32_0 = arith.constant 0 : i32
    return %c0_i32, %arg0 : i32, i32
  }
  func.func @transform_1(%arg0: i32) -> (i32, i32) {
    %c0_i32 = arith.constant 0 : i32
    %c0_i32_0 = arith.constant 0 : i32
    %c0_i32_1 = arith.constant 0 : i32
    return %c0_i32, %c0_i32_0 : i32, i32
  }
  func.func @transform_2(%arg0: i32) -> (i32, i32) {
    %c0_i32 = arith.constant 0 : i32
    %c0_i32_0 = arith.constant 0 : i32
    %c0_i32_1 = arith.constant 0 : i32
    return %c0_i32, %c0_i32_0 : i32, i32
  }
  func.func @transform_3(%arg0: i32) -> (i32, i32) {
    %c0_i32 = arith.constant 0 : i32
    %c0_i32_0 = arith.constant 0 : i32
    return %c0_i32, %arg0 : i32, i32
  }
}

</mosaic_0001>

<llo_original>
// kernel: discriminator_forward.1
$region0: #{discriminator_forward.1}
  #allocation0 [shape = 'u32[]', space=smem, size = 0x4, offset = 0x4, fixed_abs, tag = 'smem constant byte address 0x4 - core index']
  #allocation1 [shape = 'u32[144,128]{1,0:T(1,128)}', space=vmem, size = 0x12000, scoped, tag = 'internal scratch']
  %s0 = inlined_call_operand.vmem [shape: f32[2,512], index: 0, kind: input, shape index: {}]
  %s1 = inlined_call_operand.vmem [shape: f32[128,128], index: 1, kind: input, shape index: {}]
  %s2 = inlined_call_operand.vmem [shape: f32[128,6], index: 2, kind: input, shape index: {}]
  %s3 = inlined_call_operand.hbm [shape: f32[1,512], index: 3, kind: output, shape index: {}]
  %s4 = sld [smem:[#allocation0]]
  $region45: #{discriminator_forward.1} parent=0
    _
  %s6 = ssub.s32 1, %s4
  %s7 = scalar_select 0, %s6, %s4
  $region1: #{discriminator_forward.1} parent=0
    #allocation2 [shape = 'u8[2048]{0}', space=vmem, size = 0x800, scoped, tag = 'output window, operand 0']
    #allocation3 [shape = 's32[2]{0}', space=sflag, size = 0x8, scoped, tag = 'scoped memory for discriminator_forward.1']
    %8 = vsyncpa [#allocation3], 0
    %s9 = scalar_lea.sflag [#allocation3], 1
    %10 = vsyncpa %s9, 0
    loop: start=0, step=1, limit=4
    $region2: #{discriminator_forward.1} parent=1 // loop_pre_header
      _
    $region3: #{discriminator_forward.1} parent=1 // loop_header
      %s12 = sphi 0, %s16
      %p13 = scmp.ge.s32.totalorder %s12, 4
      %s22 = sphi 0, %s24
      %s25 = sphi 0, %s22
      %s26 = sphi 0, %s25
      %s42 = sphi 0, %s26
      %s46 = sphi 0, %s46
      %s48 = sphi 0, %s46
      %s49 = sphi 0, %s48
      %s63 = sphi 0, %s49
      %s67 = sphi 0, %s67
      %s69 = sphi 0, %s67
      %s70 = sphi 0, %s69
      %s84 = sphi 0, %s70
      %s90 = sphi 0, %s92
      %s93 = sphi 0, %s90
      %s94 = sphi 0, %s93
      %s110 = sphi 0, %s94
    $region4: #{discriminator_forward.1} parent=1 // loop_header_branch
      %15 = sbr.rel (%p13) target = $region8
    $region5: #{discriminator_forward.1} parent=1 // loop_body
      %s17 = ssub.s32 %s12, 1
      %s18 = ssub.s32 %s12, 2
      %s19 = sadd.s32 %s12, 1
      %s20 = ssub.s32 %s12, %s19
      %p21 = scmp.eq.s32.totalorder %s20, 0
      %s23 = sadd.s32 %s22, 1
      %s24 = scalar_select %p21, %s22, %s23
      %p27 = pneg %p21
      %p28 = scmp.eq.s32.totalorder %s12, 1
      %p29 = por %p27, %p28
      %p30 = scmp.ne.s32.totalorder %s22, %s25
      %p31 = scmp.eq.s32.totalorder %s12, 0
      %p32 = por %p30, %p31
      %p33 = scmp.ne.s32.totalorder %s22, %s25
      %p34 = scmp.eq.s32.totalorder %s17, 1
      %p35 = por %p33, %p34
      %p36 = scmp.ne.s32.totalorder %s25, %s26
      %p37 = scmp.eq.s32.totalorder %s17, 0
      %p38 = por %p36, %p37
      %p39 = scmp.ne.s32.totalorder %s25, %s26
      %p40 = scmp.eq.s32.totalorder %s18, 1
      %p41 = por %p39, %p40
      %p43 = scmp.ne.s32.totalorder %s26, %s42
      %p44 = scmp.eq.s32.totalorder %s18, 0
      %p45 = por %p43, %p44
      %s47 = sadd.s32 %s46, 1
      %p50 = scmp.eq.s32.totalorder %s12, 1
      %p51 = scmp.ne.s32.totalorder %s46, %s48
      %p52 = scmp.eq.s32.totalorder %s12, 0
      %p53 = por %p51, %p52
      %p54 = scmp.ne.s32.totalorder %s46, %s48
      %p55 = scmp.eq.s32.totalorder %s17, 1
      %p56 = por %p54, %p55
      %p57 = scmp.ne.s32.totalorder %s48, %s49
      %p58 = scmp.eq.s32.totalorder %s17, 0
      %p59 = por %p57, %p58
      %p60 = scmp.ne.s32.totalorder %s48, %s49
      %p61 = scmp.eq.s32.totalorder %s18, 1
      %p62 = por %p60, %p61
      %p64 = scmp.ne.s32.totalorder %s49, %s63
      %p65 = scmp.eq.s32.totalorder %s18, 0
      %p66 = por %p64, %p65
      %s68 = sadd.s32 %s67, 1
      %p71 = scmp.eq.s32.totalorder %s12, 1
      %p72 = scmp.ne.s32.totalorder %s67, %s69
      %p73 = scmp.eq.s32.totalorder %s12, 0
      %p74 = por %p72, %p73
      %p75 = scmp.ne.s32.totalorder %s67, %s69
      %p76 = scmp.eq.s32.totalorder %s17, 1
      %p77 = por %p75, %p76
      %p78 = scmp.ne.s32.totalorder %s69, %s70
      %p79 = scmp.eq.s32.totalorder %s17, 0
      %p80 = por %p78, %p79
      %p81 = scmp.ne.s32.totalorder %s69, %s70
      %p82 = scmp.eq.s32.totalorder %s18, 1
      %p83 = por %p81, %p82
      %p85 = scmp.ne.s32.totalorder %s70, %s84
      %p86 = scmp.eq.s32.totalorder %s18, 0
      %p87 = por %p85, %p86
      %s88 = ssub.s32 %s12, %s19
      %p89 = scmp.eq.s32.totalorder %s88, 0
      %s91 = sadd.s32 %s90, 1
      %s92 = scalar_select %p89, %s90, %s91
      %p95 = pneg %p89
      %p96 = scmp.eq.s32.totalorder %s12, 1
      %p97 = por %p95, %p96
      %p98 = scmp.ne.s32.totalorder %s90, %s93
      %p99 = scmp.eq.s32.totalorder %s12, 0
      %p100 = por %p98, %p99
      %p101 = scmp.ne.s32.totalorder %s90, %s93
      %p102 = scmp.eq.s32.totalorder %s17, 1
      %p103 = por %p101, %p102
      %p104 = scmp.ne.s32.totalorder %s93, %s94
      %p105 = scmp.eq.s32.totalorder %s17, 0
      %p106 = por %p104, %p105
      %p107 = scmp.ne.s32.totalorder %s93, %s94
      %p108 = scmp.eq.s32.totalorder %s18, 1
      %p109 = por %p107, %p108
      %p111 = scmp.ne.s32.totalorder %s94, %s110
      %p112 = scmp.eq.s32.totalorder %s18, 0
      %p113 = por %p111, %p112
      %p114 = scmp.le.s32.totalorder 1, %s12
      %p115 = scmp.lt.s32.totalorder %s12, 3
      %p116 = pnand %p114, %p115
      %p117 = pneg %p116
      // Predicated region
      $region9: #{discriminator_forward.1} parent=5 // pred_check
        _
      $region10: #{discriminator_forward.1} parent=5 // pred_check_branch
        %119 = sbr.rel (%p116) target = $region12
      $region11: #{discriminator_forward.1} parent=5 // pred_region
        %s120 = ssub.s32 %s12, 1
        // Predicated region
        $region13: #{discriminator_forward.1} parent=11 // pred_check
          %p121 = pneg %p59
        $region14: #{discriminator_forward.1} parent=11 // pred_check_branch
          %123 = sbr.rel (%p121) target = $region16
        $region15: #{discriminator_forward.1} parent=11 // pred_region
          _
        $region16: #{discriminator_forward.1} parent=11 // pred_fallthru
          _
        // Predicated region
        $region17: #{discriminator_forward.1} parent=11 // pred_check
          %p124 = pneg %p80
        $region18: #{discriminator_forward.1} parent=11 // pred_check_branch
          %126 = sbr.rel (%p124) target = $region20
        $region19: #{discriminator_forward.1} parent=11 // pred_region
          _
        $region20: #{discriminator_forward.1} parent=11 // pred_fallthru
          _
      $region12: #{discriminator_forward.1} parent=5 // pred_fallthru
        _
      %p127 = scmp.lt.s32.totalorder %s12, 2
      // Predicated region
      $region21: #{discriminator_forward.1} parent=5 // pred_check
        %p128 = pneg %p127
      $region22: #{discriminator_forward.1} parent=5 // pred_check_branch
        %130 = sbr.rel (%p128) target = $region24
      $region23: #{discriminator_forward.1} parent=5 // pred_region
        // Predicated region
        $region25: #{discriminator_forward.1} parent=23 // pred_check
          %p131 = pneg %p32
        $region26: #{discriminator_forward.1} parent=23 // pred_check_branch
          %133 = sbr.rel (%p131) target = $region28
        $region27: #{discriminator_forward.1} parent=23 // pred_region
          %s134 = smul.u32 2, %s12
          %p135 = scmp.lt.s32.totalorder %s134, 3
          %s136 = scalar_select %p135, %s134, 3
          %s137 = smul.addr %s136, 2
          %s138 = scalar_lea.vmem %s0, %s137
          %s139 = smul.u32 2, %s12
        $region28: #{discriminator_forward.1} parent=23 // pred_fallthru
          _
      $region24: #{discriminator_forward.1} parent=5 // pred_fallthru
        _
      %p140 = scmp.le.s32.totalorder 1, %s12
      %p141 = scmp.lt.s32.totalorder %s12, 3
      %p142 = pnand %p140, %p141
      %p143 = pneg %p142
      // Predicated region
      $region29: #{discriminator_forward.1} parent=5 // pred_check
        _
      $region30: #{discriminator_forward.1} parent=5 // pred_check_branch
        %145 = sbr.rel (%p142) target = $region32
      $region31: #{discriminator_forward.1} parent=5 // pred_region
        %s146 = ssub.s32 %s12, 1
        %s147 = smul.u32 2, %s17
        %p148 = scmp.lt.s32.totalorder %s147, 3
        %s149 = scalar_select %p148, %s147, 3
        %s150 = smul.addr %s149, 2
        %s151 = scalar_lea.vmem %s0, %s150
        %p152 = pneg %p38
        %p153 = pneg %p35
        %p154 = pneg %p59
        %p155 = pneg %p56
        %p156 = pneg %p80
        %p157 = pneg %p77
        %p158 = pneg %p106
        %p159 = pneg %p103
        %s160 = sand.u32 %s93, 1
        %s161 = scalar_lea.sflag [#allocation3], %s160
        %s162 = sand.u32 %s93, 1
        %s163 = smul.addr %s162, 2
        %s164 = scalar_lea.vmem [#allocation2], %s163
        %s165 = smul.u32 2, %s17
        %p166 = scmp.lt.s32.totalorder %s165, 3
        %s167 = scalar_select %p166, %s165, 3
        %s168 = smul.addr %s167, 2
        %s169 = scalar_lea.vmem %s0, %s168
        %s170 = smul.u32 2, %s17
        %s171 = smul.u32 2, %s17
        %v172 = vld [vmem:[%s169] sm:$0xf]
        %v173 = vld [vmem:[%s2] sm:$0xff]
        %v174 = vld [vmem:[%s2 + $0x8] sm:$0xff]
        %v175 = vld [vmem:[%s2 + $0x10] sm:$0xff]
        %v176 = vld [vmem:[%s2 + $0x18] sm:$0xff]
        %v177 = vld [vmem:[%s2 + $0x20] sm:$0xff]
        %v178 = vld [vmem:[%s2 + $0x28] sm:$0xff]
        %v179 = vld [vmem:[%s2 + $0x30] sm:$0xff]
        %v180 = vld [vmem:[%s2 + $0x38] sm:$0xff]
        %v181 = vld [vmem:[%s2 + $0x40] sm:$0xff]
        %v182 = vld [vmem:[%s2 + $0x48] sm:$0xff]
        %v183 = vld [vmem:[%s2 + $0x50] sm:$0xff]
        %v184 = vld [vmem:[%s2 + $0x58] sm:$0xff]
        %v185 = vld [vmem:[%s2 + $0x60] sm:$0xff]
        %v186 = vld [vmem:[%s2 + $0x68] sm:$0xff]
        %v187 = vld [vmem:[%s2 + $0x70] sm:$0xff]
        %v188 = vld [vmem:[%s2 + $0x78] sm:$0xff]
        %v189 = vld [vmem:[%s2] sm:$0x1]
        %191 = vset.pattern.permute.xlu0 0
        %192 = vperm.xlu0 %191, %v173
        %v193 = vpop.permute.xlu0 %192
        %196 = vset.pattern.permute.xlu0 0
        %197 = vperm.xlu0 %196, %v174
        %v198 = vpop.permute.xlu0 %197
        %201 = vset.pattern.permute.xlu0 0
        %202 = vperm.xlu0 %201, %v175
        %v203 = vpop.permute.xlu0 %202
        %206 = vset.pattern.permute.xlu0 0
        %207 = vperm.xlu0 %206, %v176
        %v208 = vpop.permute.xlu0 %207
        %211 = vset.pattern.permute.xlu0 0
        %212 = vperm.xlu0 %211, %v177
        %v213 = vpop.permute.xlu0 %212
        %216 = vset.pattern.permute.xlu0 0
        %217 = vperm.xlu0 %216, %v178
        %v218 = vpop.permute.xlu0 %217
        %221 = vset.pattern.permute.xlu0 0
        %222 = vperm.xlu0 %221, %v179
        %v223 = vpop.permute.xlu0 %222
        %226 = vset.pattern.permute.xlu0 0
        %227 = vperm.xlu0 %226, %v180
        %v228 = vpop.permute.xlu0 %227
        %231 = vset.pattern.permute.xlu0 0
        %232 = vperm.xlu0 %231, %v181
        %v233 = vpop.permute.xlu0 %232
        %236 = vset.pattern.permute.xlu0 0
        %237 = vperm.xlu0 %236, %v182
        %v238 = vpop.permute.xlu0 %237
        %241 = vset.pattern.permute.xlu0 0
        %242 = vperm.xlu0 %241, %v183
        %v243 = vpop.permute.xlu0 %242
        %246 = vset.pattern.permute.xlu0 0
        %247 = vperm.xlu0 %246, %v184
        %v248 = vpop.permute.xlu0 %247
        %251 = vset.pattern.permute.xlu0 0
        %252 = vperm.xlu0 %251, %v185
        %v253 = vpop.permute.xlu0 %252
        %256 = vset.pattern.permute.xlu0 0
        %257 = vperm.xlu0 %256, %v186
        %v258 = vpop.permute.xlu0 %257
        %261 = vset.pattern.permute.xlu0 0
        %262 = vperm.xlu0 %261, %v187
        %v263 = vpop.permute.xlu0 %262
        %266 = vset.pattern.permute.xlu0 0
        %267 = vperm.xlu0 %266, %v188
        %v268 = vpop.permute.xlu0 %267
        %v271 = vlaneseq
        %v272 = vshrl.u32 %v271, 7
        %v273 = vsub.s32 0, %v272
        %v274 = vrot.slane %v172, %v273
        %v275 = vlaneseq
        %v276 = vshrl.u32 %v275, 7
        %v277 = vsub.s32 2, %v276
        %v278 = vrot.slane %v172, %v277
        %v281 = vlaneseq
        %v282 = vshrl.u32 %v281, 7
        %v283 = vsub.s32 0, %v282
        %v284 = vrot.slane %v274, %v283
        %v285 = vlaneseq
        %v286 = vshrl.u32 %v285, 7
        %v287 = vsub.s32 0, %v286
        %v288 = vrot.slane %v278, %v287
        %v289 = vmul.f32 %v193, %v284
        %v290 = vmul.f32 %v193, %v288
        %v291 = vmul.f32 %v198, %v284
        %v292 = vmul.f32 %v198, %v288
        %v293 = vmul.f32 %v203, %v284
        %v294 = vmul.f32 %v203, %v288
        %v295 = vmul.f32 %v208, %v284
        %v296 = vmul.f32 %v208, %v288
        %v297 = vmul.f32 %v213, %v284
        %v298 = vmul.f32 %v213, %v288
        %v299 = vmul.f32 %v218, %v284
        %v300 = vmul.f32 %v218, %v288
        %v301 = vmul.f32 %v223, %v284
        %v302 = vmul.f32 %v223, %v288
        %v303 = vmul.f32 %v228, %v284
        %v304 = vmul.f32 %v228, %v288
        %v305 = vmul.f32 %v233, %v284
        %v306 = vmul.f32 %v233, %v288
        %v307 = vmul.f32 %v238, %v284
        %v308 = vmul.f32 %v238, %v288
        %v309 = vmul.f32 %v243, %v284
        %v310 = vmul.f32 %v243, %v288
        %v311 = vmul.f32 %v248, %v284
        %v312 = vmul.f32 %v248, %v288
        %v313 = vmul.f32 %v253, %v284
        %v314 = vmul.f32 %v253, %v288
        %v315 = vmul.f32 %v258, %v284
        %v316 = vmul.f32 %v258, %v288
        %v317 = vmul.f32 %v263, %v284
        %v318 = vmul.f32 %v263, %v288
        %v319 = vmul.f32 %v268, %v284
        %v320 = vmul.f32 %v268, %v288
        %321 = vset.pattern.permute.xlu0 2
        %322 = vperm.xlu0 %321, %v173
        %v323 = vpop.permute.xlu0 %322
        %325 = vset.pattern.permute.xlu0 2
        %326 = vperm.xlu0 %325, %v174
        %v327 = vpop.permute.xlu0 %326
        %329 = vset.pattern.permute.xlu0 2
        %330 = vperm.xlu0 %329, %v175
        %v331 = vpop.permute.xlu0 %330
        %333 = vset.pattern.permute.xlu0 2
        %334 = vperm.xlu0 %333, %v176
        %v335 = vpop.permute.xlu0 %334
        %337 = vset.pattern.permute.xlu0 2
        %338 = vperm.xlu0 %337, %v177
        %v339 = vpop.permute.xlu0 %338
        %341 = vset.pattern.permute.xlu0 2
        %342 = vperm.xlu0 %341, %v178
        %v343 = vpop.permute.xlu0 %342
        %345 = vset.pattern.permute.xlu0 2
        %346 = vperm.xlu0 %345, %v179
        %v347 = vpop.permute.xlu0 %346
        %349 = vset.pattern.permute.xlu0 2
        %350 = vperm.xlu0 %349, %v180
        %v351 = vpop.permute.xlu0 %350
        %353 = vset.pattern.permute.xlu0 2
        %354 = vperm.xlu0 %353, %v181
        %v355 = vpop.permute.xlu0 %354
        %357 = vset.pattern.permute.xlu0 2
        %358 = vperm.xlu0 %357, %v182
        %v359 = vpop.permute.xlu0 %358
        %361 = vset.pattern.permute.xlu0 2
        %362 = vperm.xlu0 %361, %v183
        %v363 = vpop.permute.xlu0 %362
        %365 = vset.pattern.permute.xlu0 2
        %366 = vperm.xlu0 %365, %v184
        %v367 = vpop.permute.xlu0 %366
        %369 = vset.pattern.permute.xlu0 2
        %370 = vperm.xlu0 %369, %v185
        %v371 = vpop.permute.xlu0 %370
        %373 = vset.pattern.permute.xlu0 2
        %374 = vperm.xlu0 %373, %v186
        %v375 = vpop.permute.xlu0 %374
        %377 = vset.pattern.permute.xlu0 2
        %378 = vperm.xlu0 %377, %v187
        %v379 = vpop.permute.xlu0 %378
        %381 = vset.pattern.permute.xlu0 2
        %382 = vperm.xlu0 %381, %v188
        %v383 = vpop.permute.xlu0 %382
        %v385 = vadd.f32 %v323, %v289
        %v386 = vadd.f32 %v323, %v290
        %v387 = vadd.f32 %v327, %v291
        %v388 = vadd.f32 %v327, %v292
        %v389 = vadd.f32 %v331, %v293
        %v390 = vadd.f32 %v331, %v294
        %v391 = vadd.f32 %v335, %v295
        %v392 = vadd.f32 %v335, %v296
        %v393 = vadd.f32 %v339, %v297
        %v394 = vadd.f32 %v339, %v298
        %v395 = vadd.f32 %v343, %v299
        %v396 = vadd.f32 %v343, %v300
        %v397 = vadd.f32 %v347, %v301
        %v398 = vadd.f32 %v347, %v302
        %v399 = vadd.f32 %v351, %v303
        %v400 = vadd.f32 %v351, %v304
        %v401 = vadd.f32 %v355, %v305
        %v402 = vadd.f32 %v355, %v306
        %v403 = vadd.f32 %v359, %v307
        %v404 = vadd.f32 %v359, %v308
        %v405 = vadd.f32 %v363, %v309
        %v406 = vadd.f32 %v363, %v310
        %v407 = vadd.f32 %v367, %v311
        %v408 = vadd.f32 %v367, %v312
        %v409 = vadd.f32 %v371, %v313
        %v410 = vadd.f32 %v371, %v314
        %v411 = vadd.f32 %v375, %v315
        %v412 = vadd.f32 %v375, %v316
        %v413 = vadd.f32 %v379, %v317
        %v414 = vadd.f32 %v379, %v318
        %v415 = vadd.f32 %v383, %v319
        %v416 = vadd.f32 %v383, %v320
        %417 = vset.pattern.permute.xlu0 1
        %418 = vperm.xlu0 %417, %v173
        %v419 = vpop.permute.xlu0 %418
        %421 = vset.pattern.permute.xlu0 1
        %422 = vperm.xlu0 %421, %v174
        %v423 = vpop.permute.xlu0 %422
        %425 = vset.pattern.permute.xlu0 1
        %426 = vperm.xlu0 %425, %v175
        %v427 = vpop.permute.xlu0 %426
        %429 = vset.pattern.permute.xlu0 1
        %430 = vperm.xlu0 %429, %v176
        %v431 = vpop.permute.xlu0 %430
        %433 = vset.pattern.permute.xlu0 1
        %434 = vperm.xlu0 %433, %v177
        %v435 = vpop.permute.xlu0 %434
        %437 = vset.pattern.permute.xlu0 1
        %438 = vperm.xlu0 %437, %v178
        %v439 = vpop.permute.xlu0 %438
        %441 = vset.pattern.permute.xlu0 1
        %442 = vperm.xlu0 %441, %v179
        %v443 = vpop.permute.xlu0 %442
        %445 = vset.pattern.permute.xlu0 1
        %446 = vperm.xlu0 %445, %v180
        %v447 = vpop.permute.xlu0 %446
        %449 = vset.pattern.permute.xlu0 1
        %450 = vperm.xlu0 %449, %v181
        %v451 = vpop.permute.xlu0 %450
        %453 = vset.pattern.permute.xlu0 1
        %454 = vperm.xlu0 %453, %v182
        %v455 = vpop.permute.xlu0 %454
        %457 = vset.pattern.permute.xlu0 1
        %458 = vperm.xlu0 %457, %v183
        %v459 = vpop.permute.xlu0 %458
        %461 = vset.pattern.permute.xlu0 1
        %462 = vperm.xlu0 %461, %v184
        %v463 = vpop.permute.xlu0 %462
        %465 = vset.pattern.permute.xlu0 1
        %466 = vperm.xlu0 %465, %v185
        %v467 = vpop.permute.xlu0 %466
        %469 = vset.pattern.permute.xlu0 1
        %470 = vperm.xlu0 %469, %v186
        %v471 = vpop.permute.xlu0 %470
        %473 = vset.pattern.permute.xlu0 1
        %474 = vperm.xlu0 %473, %v187
        %v475 = vpop.permute.xlu0 %474
        %477 = vset.pattern.permute.xlu0 1
        %478 = vperm.xlu0 %477, %v188
        %v479 = vpop.permute.xlu0 %478
        %v481 = vlaneseq
        %v482 = vshrl.u32 %v481, 7
        %v483 = vsub.s32 1, %v482
        %v484 = vrot.slane %v172, %v483
        %v485 = vlaneseq
        %v486 = vshrl.u32 %v485, 7
        %v487 = vsub.s32 3, %v486
        %v488 = vrot.slane %v172, %v487
        %v491 = vlaneseq
        %v492 = vshrl.u32 %v491, 7
        %v493 = vsub.s32 1, %v492
        %v494 = vrot.slane %v484, %v493
        %v495 = vlaneseq
        %v496 = vshrl.u32 %v495, 7
        %v497 = vsub.s32 1, %v496
        %v498 = vrot.slane %v488, %v497
        %v499 = vmul.f32 %v419, %v494
        %v500 = vmul.f32 %v419, %v498
        %v501 = vmul.f32 %v423, %v494
        %v502 = vmul.f32 %v423, %v498
        %v503 = vmul.f32 %v427, %v494
        %v504 = vmul.f32 %v427, %v498
        %v505 = vmul.f32 %v431, %v494
        %v506 = vmul.f32 %v431, %v498
        %v507 = vmul.f32 %v435, %v494
        %v508 = vmul.f32 %v435, %v498
        %v509 = vmul.f32 %v439, %v494
        %v510 = vmul.f32 %v439, %v498
        %v511 = vmul.f32 %v443, %v494
        %v512 = vmul.f32 %v443, %v498
        %v513 = vmul.f32 %v447, %v494
        %v514 = vmul.f32 %v447, %v498
        %v515 = vmul.f32 %v451, %v494
        %v516 = vmul.f32 %v451, %v498
        %v517 = vmul.f32 %v455, %v494
        %v518 = vmul.f32 %v455, %v498
        %v519 = vmul.f32 %v459, %v494
        %v520 = vmul.f32 %v459, %v498
        %v521 = vmul.f32 %v463, %v494
        %v522 = vmul.f32 %v463, %v498
        %v523 = vmul.f32 %v467, %v494
        %v524 = vmul.f32 %v467, %v498
        %v525 = vmul.f32 %v471, %v494
        %v526 = vmul.f32 %v471, %v498
        %v527 = vmul.f32 %v475, %v494
        %v528 = vmul.f32 %v475, %v498
        %v529 = vmul.f32 %v479, %v494
        %v530 = vmul.f32 %v479, %v498
        %v531 = vadd.f32 %v385, %v499
        %v532 = vadd.f32 %v386, %v500
        %v533 = vadd.f32 %v387, %v501
        %v534 = vadd.f32 %v388, %v502
        %v535 = vadd.f32 %v389, %v503
        %v536 = vadd.f32 %v390, %v504
        %v537 = vadd.f32 %v391, %v505
        %v538 = vadd.f32 %v392, %v506
        %v539 = vadd.f32 %v393, %v507
        %v540 = vadd.f32 %v394, %v508
        %v541 = vadd.f32 %v395, %v509
        %v542 = vadd.f32 %v396, %v510
        %v543 = vadd.f32 %v397, %v511
        %v544 = vadd.f32 %v398, %v512
        %v545 = vadd.f32 %v399, %v513
        %v546 = vadd.f32 %v400, %v514
        %v547 = vadd.f32 %v401, %v515
        %v548 = vadd.f32 %v402, %v516
        %v549 = vadd.f32 %v403, %v517
        %v550 = vadd.f32 %v404, %v518
        %v551 = vadd.f32 %v405, %v519
        %v552 = vadd.f32 %v406, %v520
        %v553 = vadd.f32 %v407, %v521
        %v554 = vadd.f32 %v408, %v522
        %v555 = vadd.f32 %v409, %v523
        %v556 = vadd.f32 %v410, %v524
        %v557 = vadd.f32 %v411, %v525
        %v558 = vadd.f32 %v412, %v526
        %v559 = vadd.f32 %v413, %v527
        %v560 = vadd.f32 %v414, %v528
        %v561 = vadd.f32 %v415, %v529
        %v562 = vadd.f32 %v416, %v530
        %v563 = vmul.f32 %v531, 0.01
        %v564 = vmul.f32 %v532, 0.01
        %v565 = vmul.f32 %v533, 0.01
        %v566 = vmul.f32 %v534, 0.01
        %v567 = vmul.f32 %v535, 0.01
        %v568 = vmul.f32 %v536, 0.01
        %v569 = vmul.f32 %v537, 0.01
        %v570 = vmul.f32 %v538, 0.01
        %v571 = vmul.f32 %v539, 0.01
        %v572 = vmul.f32 %v540, 0.01
        %v573 = vmul.f32 %v541, 0.01
        %v574 = vmul.f32 %v542, 0.01
        %v575 = vmul.f32 %v543, 0.01
        %v576 = vmul.f32 %v544, 0.01
        %v577 = vmul.f32 %v545, 0.01
        %v578 = vmul.f32 %v546, 0.01
        %v579 = vmul.f32 %v547, 0.01
        %v580 = vmul.f32 %v548, 0.01
        %v581 = vmul.f32 %v549, 0.01
        %v582 = vmul.f32 %v550, 0.01
        %v583 = vmul.f32 %v551, 0.01
        %v584 = vmul.f32 %v552, 0.01
        %v585 = vmul.f32 %v553, 0.01
        %v586 = vmul.f32 %v554, 0.01
        %v587 = vmul.f32 %v555, 0.01
        %v588 = vmul.f32 %v556, 0.01
        %v589 = vmul.f32 %v557, 0.01
        %v590 = vmul.f32 %v558, 0.01
        %v591 = vmul.f32 %v559, 0.01
        %v592 = vmul.f32 %v560, 0.01
        %v593 = vmul.f32 %v561, 0.01
        %v594 = vmul.f32 %v562, 0.01
        %v595 = vmax.f32 %v531, %v563
        %v596 = vmax.f32 %v532, %v564
        %v597 = vmax.f32 %v533, %v565
        %v598 = vmax.f32 %v534, %v566
        %v599 = vmax.f32 %v535, %v567
        %v600 = vmax.f32 %v536, %v568
        %v601 = vmax.f32 %v537, %v569
        %v602 = vmax.f32 %v538, %v570
        %v603 = vmax.f32 %v539, %v571
        %v604 = vmax.f32 %v540, %v572
        %v605 = vmax.f32 %v541, %v573
        %v606 = vmax.f32 %v542, %v574
        %v607 = vmax.f32 %v543, %v575
        %v608 = vmax.f32 %v544, %v576
        %v609 = vmax.f32 %v545, %v577
        %v610 = vmax.f32 %v546, %v578
        %v611 = vmax.f32 %v547, %v579
        %v612 = vmax.f32 %v548, %v580
        %v613 = vmax.f32 %v549, %v581
        %v614 = vmax.f32 %v550, %v582
        %v615 = vmax.f32 %v551, %v583
        %v616 = vmax.f32 %v552, %v584
        %v617 = vmax.f32 %v553, %v585
        %v618 = vmax.f32 %v554, %v586
        %v619 = vmax.f32 %v555, %v587
        %v620 = vmax.f32 %v556, %v588
        %v621 = vmax.f32 %v557, %v589
        %v622 = vmax.f32 %v558, %v590
        %v623 = vmax.f32 %v559, %v591
        %v624 = vmax.f32 %v560, %v592
        %v625 = vmax.f32 %v561, %v593
        %v626 = vmax.f32 %v562, %v594
        %v627 = vld [vmem:[%s1] sm:$0xff]
        %v628 = vld [vmem:[%s1 + $0x8] sm:$0xff]
        %v629 = vld [vmem:[%s1 + $0x10] sm:$0xff]
        %v630 = vld [vmem:[%s1 + $0x18] sm:$0xff]
        %v631 = vld [vmem:[%s1 + $0x20] sm:$0xff]
        %v632 = vld [vmem:[%s1 + $0x28] sm:$0xff]
        %v633 = vld [vmem:[%s1 + $0x30] sm:$0xff]
        %v634 = vld [vmem:[%s1 + $0x38] sm:$0xff]
        %v635 = vld [vmem:[%s1 + $0x40] sm:$0xff]
        %v636 = vld [vmem:[%s1 + $0x48] sm:$0xff]
        %v637 = vld [vmem:[%s1 + $0x50] sm:$0xff]
        %v638 = vld [vmem:[%s1 + $0x58] sm:$0xff]
        %v639 = vld [vmem:[%s1 + $0x60] sm:$0xff]
        %v640 = vld [vmem:[%s1 + $0x68] sm:$0xff]
        %v641 = vld [vmem:[%s1 + $0x70] sm:$0xff]
        %v642 = vld [vmem:[%s1 + $0x78] sm:$0xff]
        %643 = vset.pattern.permute.xlu0 3
        %644 = vperm.xlu0 %643, %v173
        %v645 = vpop.permute.xlu0 %644
        %647 = vset.pattern.permute.xlu0 3
        %648 = vperm.xlu0 %647, %v174
        %v649 = vpop.permute.xlu0 %648
        %651 = vset.pattern.permute.xlu0 3
        %652 = vperm.xlu0 %651, %v175
        %v653 = vpop.permute.xlu0 %652
        %655 = vset.pattern.permute.xlu0 3
        %656 = vperm.xlu0 %655, %v176
        %v657 = vpop.permute.xlu0 %656
        %659 = vset.pattern.permute.xlu0 3
        %660 = vperm.xlu0 %659, %v177
        %v661 = vpop.permute.xlu0 %660
        %663 = vset.pattern.permute.xlu0 3
        %664 = vperm.xlu0 %663, %v178
        %v665 = vpop.permute.xlu0 %664
        %667 = vset.pattern.permute.xlu0 3
        %668 = vperm.xlu0 %667, %v179
        %v669 = vpop.permute.xlu0 %668
        %671 = vset.pattern.permute.xlu0 3
        %672 = vperm.xlu0 %671, %v180
        %v673 = vpop.permute.xlu0 %672
        %675 = vset.pattern.permute.xlu0 3
        %676 = vperm.xlu0 %675, %v181
        %v677 = vpop.permute.xlu0 %676
        %679 = vset.pattern.permute.xlu0 3
        %680 = vperm.xlu0 %679, %v182
        %v681 = vpop.permute.xlu0 %680
        %683 = vset.pattern.permute.xlu0 3
        %684 = vperm.xlu0 %683, %v183
        %v685 = vpop.permute.xlu0 %684
        %687 = vset.pattern.permute.xlu0 3
        %688 = vperm.xlu0 %687, %v184
        %v689 = vpop.permute.xlu0 %688
        %691 = vset.pattern.permute.xlu0 3
        %692 = vperm.xlu0 %691, %v185
        %v693 = vpop.permute.xlu0 %692
        %695 = vset.pattern.permute.xlu0 3
        %696 = vperm.xlu0 %695, %v186
        %v697 = vpop.permute.xlu0 %696
        %699 = vset.pattern.permute.xlu0 3
        %700 = vperm.xlu0 %699, %v187
        %v701 = vpop.permute.xlu0 %700
        %703 = vset.pattern.permute.xlu0 3
        %704 = vperm.xlu0 %703, %v188
        %v705 = vpop.permute.xlu0 %704
        %707 = vmatprep.subr.mxu0 %v596
        %708 = vmatpush1.msra.mxu0 %v595
        %709 = vmatprep.subr.mxu0 %v598
        %710 = vmatpush1.msra.mxu0 %v597
        %711 = vmatprep.subr.mxu0 %v600
        %712 = vmatpush1.msra.mxu0 %v599
        %713 = vmatprep.subr.mxu0 %v602
        %714 = vmatpush1.msra.mxu0 %v601
        %715 = vmatprep.subr.mxu0 %v604
        %716 = vmatpush1.msra.mxu0 %v603
        %717 = vmatprep.subr.mxu0 %v606
        %718 = vmatpush1.msra.mxu0 %v605
        %719 = vmatprep.subr.mxu0 %v608
        %720 = vmatpush1.msra.mxu0 %v607
        %721 = vmatprep.subr.mxu0 %v610
        %722 = vmatpush1.msra.mxu0 %v609
        %723 = vmatprep.subr.mxu0 %v612
        %724 = vmatpush1.msra.mxu0 %v611
        %725 = vmatprep.subr.mxu0 %v614
        %726 = vmatpush1.msra.mxu0 %v613
        %727 = vmatprep.subr.mxu0 %v616
        %728 = vmatpush1.msra.mxu0 %v615
        %729 = vmatprep.subr.mxu0 %v618
        %730 = vmatpush1.msra.mxu0 %v617
        %731 = vmatprep.subr.mxu0 %v620
        %732 = vmatpush1.msra.mxu0 %v619
        %733 = vmatprep.subr.mxu0 %v622
        %734 = vmatpush1.msra.mxu0 %v621
        %735 = vmatprep.subr.mxu0 %v624
        %736 = vmatpush1.msra.mxu0 %v623
        %737 = vmatprep.subr.mxu0 %v626
        %738 = vmatpush1.msra.mxu0 %v625
        %739 = vmatprep.subr.mxu0 0.0
        %740 = vmatpush1.msra.mxu0 0.0
        %741 = vmatprep.subr.mxu0 0.0
        %742 = vmatpush1.msra.mxu0 0.0
        %743 = vmatprep.subr.mxu0 0.0
        %744 = vmatpush1.msra.mxu0 0.0
        %745 = vmatprep.subr.mxu0 0.0
        %746 = vmatpush1.msra.mxu0 0.0
        %747 = vmatprep.subr.mxu0 0.0
        %748 = vmatpush1.msra.mxu0 0.0
        %749 = vmatprep.subr.mxu0 0.0
        %750 = vmatpush1.msra.mxu0 0.0
        %751 = vmatprep.subr.mxu0 0.0
        %752 = vmatpush1.msra.mxu0 0.0
        %753 = vmatprep.subr.mxu0 0.0
        %754 = vmatpush1.msra.mxu0 0.0
        %755 = vmatprep.subr.mxu0 0.0
        %756 = vmatpush1.msra.mxu0 0.0
        %757 = vmatprep.subr.mxu0 0.0
        %758 = vmatpush1.msra.mxu0 0.0
        %759 = vmatprep.subr.mxu0 0.0
        %760 = vmatpush1.msra.mxu0 0.0
        %761 = vmatprep.subr.mxu0 0.0
        %762 = vmatpush1.msra.mxu0 0.0
        %763 = vmatprep.subr.mxu0 0.0
        %764 = vmatpush1.msra.mxu0 0.0
        %765 = vmatprep.subr.mxu0 0.0
        %766 = vmatpush1.msra.mxu0 0.0
        %767 = vmatprep.subr.mxu0 0.0
        %768 = vmatpush1.msra.mxu0 0.0
        %769 = vmatprep.subr.mxu0 0.0
        %770 = vmatpush1.msra.mxu0 0.0
        %771 = vmatprep.mubr.f32.mxu0 0.0
        %772 = vmatmul.mubr.f32.gmra.mrb[0].mxu0 %v627
        %v773 = vpop.f32.mrb[0].mxu0
        %v774 = vadd.f32 %v645, %v773
        %v775 = vpop.f32.mrb[0].mxu0
        %v776 = vadd.f32 %v645, %v775
        %777 = vmatprep.mubr.f32.mxu0 0.0
        %778 = vmatmul.mubr.f32.gmra.mrb[0].mxu0 %v628
        %v779 = vpop.f32.mrb[0].mxu0
        %v780 = vadd.f32 %v649, %v779
        %v781 = vpop.f32.mrb[0].mxu0
        %v782 = vadd.f32 %v649, %v781
        %783 = vmatprep.mubr.f32.mxu0 0.0
        %784 = vmatmul.mubr.f32.gmra.mrb[0].mxu0 %v629
        %v785 = vpop.f32.mrb[0].mxu0
        %v786 = vadd.f32 %v653, %v785
        %v787 = vpop.f32.mrb[0].mxu0
        %v788 = vadd.f32 %v653, %v787
        %789 = vmatprep.mubr.f32.mxu0 0.0
        %790 = vmatmul.mubr.f32.gmra.mrb[0].mxu0 %v630
        %v791 = vpop.f32.mrb[0].mxu0
        %v792 = vadd.f32 %v657, %v791
        %v793 = vpop.f32.mrb[0].mxu0
        %v794 = vadd.f32 %v657, %v793
        %795 = vmatprep.mubr.f32.mxu0 0.0
        %796 = vmatmul.mubr.f32.gmra.mrb[0].mxu0 %v631
        %v797 = vpop.f32.mrb[0].mxu0
        %v798 = vadd.f32 %v661, %v797
        %v799 = vpop.f32.mrb[0].mxu0
        %v800 = vadd.f32 %v661, %v799
        %801 = vmatprep.mubr.f32.mxu0 0.0
        %802 = vmatmul.mubr.f32.gmra.mrb[0].mxu0 %v632
        %v803 = vpop.f32.mrb[0].mxu0
        %v804 = vadd.f32 %v665, %v803
        %v805 = vpop.f32.mrb[0].mxu0
        %v806 = vadd.f32 %v665, %v805
        %807 = vmatprep.mubr.f32.mxu0 0.0
        %808 = vmatmul.mubr.f32.gmra.mrb[0].mxu0 %v633
        %v809 = vpop.f32.mrb[0].mxu0
        %v810 = vadd.f32 %v669, %v809
        %v811 = vpop.f32.mrb[0].mxu0
        %v812 = vadd.f32 %v669, %v811
        %813 = vmatprep.mubr.f32.mxu0 0.0
        %814 = vmatmul.mubr.f32.gmra.mrb[0].mxu0 %v634
        %v815 = vpop.f32.mrb[0].mxu0
        %v816 = vadd.f32 %v673, %v815
        %v817 = vpop.f32.mrb[0].mxu0
        %v818 = vadd.f32 %v673, %v817
        %819 = vmatprep.mubr.f32.mxu0 0.0
        %820 = vmatmul.mubr.f32.gmra.mrb[0].mxu0 %v635
        %v821 = vpop.f32.mrb[0].mxu0
        %v822 = vadd.f32 %v677, %v821
        %v823 = vpop.f32.mrb[0].mxu0
        %v824 = vadd.f32 %v677, %v823
        %825 = vmatprep.mubr.f32.mxu0 0.0
        %826 = vmatmul.mubr.f32.gmra.mrb[0].mxu0 %v636
        %v827 = vpop.f32.mrb[0].mxu0
        %v828 = vadd.f32 %v681, %v827
        %v829 = vpop.f32.mrb[0].mxu0
        %v830 = vadd.f32 %v681, %v829
        %831 = vmatprep.mubr.f32.mxu0 0.0
        %832 = vmatmul.mubr.f32.gmra.mrb[0].mxu0 %v637
        %v833 = vpop.f32.mrb[0].mxu0
        %v834 = vadd.f32 %v685, %v833
        %v835 = vpop.f32.mrb[0].mxu0
        %v836 = vadd.f32 %v685, %v835
        %837 = vmatprep.mubr.f32.mxu0 0.0
        %838 = vmatmul.mubr.f32.gmra.mrb[0].mxu0 %v638
        %v839 = vpop.f32.mrb[0].mxu0
        %v840 = vadd.f32 %v689, %v839
        %v841 = vpop.f32.mrb[0].mxu0
        %v842 = vadd.f32 %v689, %v841
        %843 = vmatprep.mubr.f32.mxu0 0.0
        %844 = vmatmul.mubr.f32.gmra.mrb[0].mxu0 %v639
        %v845 = vpop.f32.mrb[0].mxu0
        %v846 = vadd.f32 %v693, %v845
        %v847 = vpop.f32.mrb[0].mxu0
        %v848 = vadd.f32 %v693, %v847
        %849 = vmatprep.mubr.f32.mxu0 0.0
        %850 = vmatmul.mubr.f32.gmra.mrb[0].mxu0 %v640
        %v851 = vpop.f32.mrb[0].mxu0
        %v852 = vadd.f32 %v697, %v851
        %v853 = vpop.f32.mrb[0].mxu0
        %v854 = vadd.f32 %v697, %v853
        %855 = vmatprep.mubr.f32.mxu0 0.0
        %856 = vmatmul.mubr.f32.gmra.mrb[0].mxu0 %v641
        %v857 = vpop.f32.mrb[0].mxu0
        %v858 = vadd.f32 %v701, %v857
        %v859 = vpop.f32.mrb[0].mxu0
        %v860 = vadd.f32 %v701, %v859
        %861 = vmatprep.mubr.f32.mxu0 0.0
        %862 = vmatmul.mubr.f32.gmra.mrb[0].mxu0 %v642
        %v863 = vpop.f32.mrb[0].mxu0
        %v864 = vadd.f32 %v705, %v863
        %v865 = vpop.f32.mrb[0].mxu0
        %v866 = vadd.f32 %v705, %v865
        %867 = vdwg.mxu0
        %v868 = vmul.f32 %v774, 0.01
        %v869 = vmul.f32 %v776, 0.01
        %v870 = vmul.f32 %v780, 0.01
        %v871 = vmul.f32 %v782, 0.01
        %v872 = vmul.f32 %v786, 0.01
        %v873 = vmul.f32 %v788, 0.01
        %v874 = vmul.f32 %v792, 0.01
        %v875 = vmul.f32 %v794, 0.01
        %v876 = vmul.f32 %v798, 0.01
        %v877 = vmul.f32 %v800, 0.01
        %v878 = vmul.f32 %v804, 0.01
        %v879 = vmul.f32 %v806, 0.01
        %v880 = vmul.f32 %v810, 0.01
        %v881 = vmul.f32 %v812, 0.01
        %v882 = vmul.f32 %v816, 0.01
        %v883 = vmul.f32 %v818, 0.01
        %v884 = vmul.f32 %v822, 0.01
        %v885 = vmul.f32 %v824, 0.01
        %v886 = vmul.f32 %v828, 0.01
        %v887 = vmul.f32 %v830, 0.01
        %v888 = vmul.f32 %v834, 0.01
        %v889 = vmul.f32 %v836, 0.01
        %v890 = vmul.f32 %v840, 0.01
        %v891 = vmul.f32 %v842, 0.01
        %v892 = vmul.f32 %v846, 0.01
        %v893 = vmul.f32 %v848, 0.01
        %v894 = vmul.f32 %v852, 0.01
        %v895 = vmul.f32 %v854, 0.01
        %v896 = vmul.f32 %v858, 0.01
        %v897 = vmul.f32 %v860, 0.01
        %v898 = vmul.f32 %v864, 0.01
        %v899 = vmul.f32 %v866, 0.01
        %v900 = vmax.f32 %v774, %v868
        %v901 = vmax.f32 %v776, %v869
        %v902 = vmax.f32 %v780, %v870
        %v903 = vmax.f32 %v782, %v871
        %v904 = vmax.f32 %v786, %v872
        %v905 = vmax.f32 %v788, %v873
        %v906 = vmax.f32 %v792, %v874
        %v907 = vmax.f32 %v794, %v875
        %v908 = vmax.f32 %v798, %v876
        %v909 = vmax.f32 %v800, %v877
        %v910 = vmax.f32 %v804, %v878
        %v911 = vmax.f32 %v806, %v879
        %v912 = vmax.f32 %v810, %v880
        %v913 = vmax.f32 %v812, %v881
        %v914 = vmax.f32 %v816, %v882
        %v915 = vmax.f32 %v818, %v883
        %v916 = vmax.f32 %v822, %v884
        %v917 = vmax.f32 %v824, %v885
        %v918 = vmax.f32 %v828, %v886
        %v919 = vmax.f32 %v830, %v887
        %v920 = vmax.f32 %v834, %v888
        %v921 = vmax.f32 %v836, %v889
        %v922 = vmax.f32 %v840, %v890
        %v923 = vmax.f32 %v842, %v891
        %v924 = vmax.f32 %v846, %v892
        %v925 = vmax.f32 %v848, %v893
        %v926 = vmax.f32 %v852, %v894
        %v927 = vmax.f32 %v854, %v895
        %v928 = vmax.f32 %v858, %v896
        %v929 = vmax.f32 %v860, %v897
        %v930 = vmax.f32 %v864, %v898
        %v931 = vmax.f32 %v866, %v899
        %932 = vset.pattern.permute.xlu0 4
        %933 = vperm.xlu0 %932, %v173
        %v934 = vpop.permute.xlu0 %933
        %936 = vset.pattern.permute.xlu0 4
        %937 = vperm.xlu0 %936, %v174
        %v938 = vpop.permute.xlu0 %937
        %940 = vset.pattern.permute.xlu0 4
        %941 = vperm.xlu0 %940, %v175
        %v942 = vpop.permute.xlu0 %941
        %944 = vset.pattern.permute.xlu0 4
        %945 = vperm.xlu0 %944, %v176
        %v946 = vpop.permute.xlu0 %945
        %948 = vset.pattern.permute.xlu0 4
        %949 = vperm.xlu0 %948, %v177
        %v950 = vpop.permute.xlu0 %949
        %952 = vset.pattern.permute.xlu0 4
        %953 = vperm.xlu0 %952, %v178
        %v954 = vpop.permute.xlu0 %953
        %956 = vset.pattern.permute.xlu0 4
        %957 = vperm.xlu0 %956, %v179
        %v958 = vpop.permute.xlu0 %957
        %960 = vset.pattern.permute.xlu0 4
        %961 = vperm.xlu0 %960, %v180
        %v962 = vpop.permute.xlu0 %961
        %964 = vset.pattern.permute.xlu0 4
        %965 = vperm.xlu0 %964, %v181
        %v966 = vpop.permute.xlu0 %965
        %968 = vset.pattern.permute.xlu0 4
        %969 = vperm.xlu0 %968, %v182
        %v970 = vpop.permute.xlu0 %969
        %972 = vset.pattern.permute.xlu0 4
        %973 = vperm.xlu0 %972, %v183
        %v974 = vpop.permute.xlu0 %973
        %976 = vset.pattern.permute.xlu0 4
        %977 = vperm.xlu0 %976, %v184
        %v978 = vpop.permute.xlu0 %977
        %980 = vset.pattern.permute.xlu0 4
        %981 = vperm.xlu0 %980, %v185
        %v982 = vpop.permute.xlu0 %981
        %984 = vset.pattern.permute.xlu0 4
        %985 = vperm.xlu0 %984, %v186
        %v986 = vpop.permute.xlu0 %985
        %988 = vset.pattern.permute.xlu0 4
        %989 = vperm.xlu0 %988, %v187
        %v990 = vpop.permute.xlu0 %989
        %992 = vset.pattern.permute.xlu0 4
        %993 = vperm.xlu0 %992, %v188
        %v994 = vpop.permute.xlu0 %993
        %v996 = vmul.f32 %v934, %v900
        %v997 = vmul.f32 %v934, %v901
        %v998 = vmul.f32 %v938, %v902
        %v999 = vmul.f32 %v938, %v903
        %v1000 = vmul.f32 %v942, %v904
        %v1001 = vmul.f32 %v942, %v905
        %v1002 = vmul.f32 %v946, %v906
        %v1003 = vmul.f32 %v946, %v907
        %v1004 = vmul.f32 %v950, %v908
        %v1005 = vmul.f32 %v950, %v909
        %v1006 = vmul.f32 %v954, %v910
        %v1007 = vmul.f32 %v954, %v911
        %v1008 = vmul.f32 %v958, %v912
        %v1009 = vmul.f32 %v958, %v913
        %v1010 = vmul.f32 %v962, %v914
        %v1011 = vmul.f32 %v962, %v915
        %v1012 = vmul.f32 %v966, %v916
        %v1013 = vmul.f32 %v966, %v917
        %v1014 = vmul.f32 %v970, %v918
        %v1015 = vmul.f32 %v970, %v919
        %v1016 = vmul.f32 %v974, %v920
        %v1017 = vmul.f32 %v974, %v921
        %v1018 = vmul.f32 %v978, %v922
        %v1019 = vmul.f32 %v978, %v923
        %v1020 = vmul.f32 %v982, %v924
        %v1021 = vmul.f32 %v982, %v925
        %v1022 = vmul.f32 %v986, %v926
        %v1023 = vmul.f32 %v986, %v927
        %v1024 = vmul.f32 %v990, %v928
        %v1025 = vmul.f32 %v990, %v929
        %v1026 = vmul.f32 %v994, %v930
        %v1027 = vmul.f32 %v994, %v931
        %v1028 = vadd.f32 %v996, %v998
        %v1029 = vadd.f32 %v1028, %v1000
        %v1030 = vadd.f32 %v1029, %v1002
        %v1031 = vadd.f32 %v1030, %v1004
        %v1032 = vadd.f32 %v1031, %v1006
        %v1033 = vadd.f32 %v1032, %v1008
        %v1034 = vadd.f32 %v1033, %v1010
        %v1035 = vadd.f32 %v1034, %v1012
        %v1036 = vadd.f32 %v1035, %v1014
        %v1037 = vadd.f32 %v1036, %v1016
        %v1038 = vadd.f32 %v1037, %v1018
        %v1039 = vadd.f32 %v1038, %v1020
        %v1040 = vadd.f32 %v1039, %v1022
        %v1041 = vadd.f32 %v1040, %v1024
        %v1042 = vadd.f32 %v1041, %v1026
        %v1043 = vrot.slane %v1042, 4
        %v1044 = vadd.f32 %v1042, %v1043
        %v1045 = vrot.slane %v1044, 2
        %v1046 = vadd.f32 %v1044, %v1045
        %v1047 = vrot.slane %v1046, 1
        %v1048 = vadd.f32 %v1046, %v1047
        %v1049 = vadd.f32 %v997, %v999
        %v1050 = vadd.f32 %v1049, %v1001
        %v1051 = vadd.f32 %v1050, %v1003
        %v1052 = vadd.f32 %v1051, %v1005
        %v1053 = vadd.f32 %v1052, %v1007
        %v1054 = vadd.f32 %v1053, %v1009
        %v1055 = vadd.f32 %v1054, %v1011
        %v1056 = vadd.f32 %v1055, %v1013
        %v1057 = vadd.f32 %v1056, %v1015
        %v1058 = vadd.f32 %v1057, %v1017
        %v1059 = vadd.f32 %v1058, %v1019
        %v1060 = vadd.f32 %v1059, %v1021
        %v1061 = vadd.f32 %v1060, %v1023
        %v1062 = vadd.f32 %v1061, %v1025
        %v1063 = vadd.f32 %v1062, %v1027
        %v1064 = vrot.slane %v1063, 4
        %v1065 = vadd.f32 %v1063, %v1064
        %v1066 = vrot.slane %v1065, 2
        %v1067 = vadd.f32 %v1065, %v1066
        %v1068 = vrot.slane %v1067, 1
        %v1069 = vadd.f32 %v1067, %v1068
        %1071 = vset.pattern.permute.xlu0 5
        %1072 = vperm.xlu0 %1071, %v189
        %v1073 = vpop.permute.xlu0 %1072
        %v1075 = vadd.f32 %v1048, %v1073
        %v1076 = vadd.f32 %v1069, %v1073
        %v1077 = vxor.u32 %v1075, 2147483648
        %v1078 = vxor.u32 %v1076, 2147483648
        %v1079 = vmul.f32 %v1077, 1.442695
        %v1080 = vpow.pop %v1079
        %v1081 = vmul.f32 %v1078, 1.442695
        %v1082 = vpow.pop %v1081
        %v1083 = vadd.f32 %v1080, 1.0
        %v1084 = vadd.f32 %v1082, 1.0
        %v1085 = vrcp.pop %v1083
        %v1086 = vmul.f32 1.0, %v1085
        %v1087 = vrcp.pop %v1084
        %v1088 = vmul.f32 1.0, %v1087
        %v1091 = vcombine.low %v1086, %v1088
        %v1093 = vunpack.c.l.s4 1966171168
        %v1094 = vunpack.c.0.s8 %v1093
        %v1095 = vlaneseq
        %v1096 = vshrl.u32 %v1095, 7
        %v1097 = vsub.s32 %v1094, %v1096
        %v1098 = vrot.slane %v1091, %v1097
        %v1100 = vunpack.c.l.s4 1966171168
        %v1101 = vunpack.c.0.s8 %v1100
        %v1102 = vlaneseq
        %v1103 = vshrl.u32 %v1102, 7
        %v1104 = vsub.s32 %v1101, %v1103
        %v1105 = vrot.slane %v1098, %v1104
        %v1107 = vlaneseq
        %vm1108 = vcmp.ge.s32.totalorder %v1107, 0
        %vm1109 = vcmp.lt.s32.totalorder %v1107, 256
        %vm1110 = vmand %vm1108, %vm1109
        %1111 = vst.msk [vmem:[%s164] sm:$0x3] %vm1110, %v1105
        %s1112 = sand.u32 %s93, 1
        %s1113 = scalar_lea.sflag [#allocation3], %s1112
        %s1114 = sand.u32 %s93, 1
        %s1115 = smul.addr %s1114, 2
        %s1116 = scalar_lea.vmem [#allocation2], %s1115
        // Predicated region
        $region33: #{discriminator_forward.1} parent=31 // pred_check
          %p1117 = pneg %p103
        $region34: #{discriminator_forward.1} parent=31 // pred_check_branch
          %1119 = sbr.rel (%p1117) target = $region36
        $region35: #{discriminator_forward.1} parent=31 // pred_region
          %s1120 = smul.u32 2, %s17
          %s1122 = ssub.s32 32, 32
          %1123 = vsyncadd %s1113, %s1122
          %s1124 = smul.addr %s1120, 16
          %s1125 = scalar_lea.hbm %s3, %s1124
          %s1127 = sshll.u32 %s1116, 4
          %s1128 = int_to_ptr.vmem [resolvable:$true] %s1127
          %1130 = dma.vmem_to_hbm [thread:$0]  %s1128, 32, %s1125, %s1113
        $region36: #{discriminator_forward.1} parent=31 // pred_fallthru
          _
      $region32: #{discriminator_forward.1} parent=5 // pred_fallthru
        _
      %p1131 = scmp.le.s32.totalorder 2, %s12
      // Predicated region
      $region37: #{discriminator_forward.1} parent=5 // pred_check
        %p1132 = pneg %p1131
      $region38: #{discriminator_forward.1} parent=5 // pred_check_branch
        %1134 = sbr.rel (%p1132) target = $region40
      $region39: #{discriminator_forward.1} parent=5 // pred_region
        %s1135 = ssub.s32 %s12, 2
        // Predicated region
        $region41: #{discriminator_forward.1} parent=39 // pred_check
          %p1136 = pneg %p109
        $region42: #{discriminator_forward.1} parent=39 // pred_check_branch
          %1138 = sbr.rel (%p1136) target = $region44
        $region43: #{discriminator_forward.1} parent=39 // pred_region
          %s1139 = sand.u32 %s94, 1
          %s1140 = scalar_lea.sflag [#allocation3], %s1139
          %s1141 = sand.u32 %s94, 1
          %s1142 = smul.addr %s1141, 2
          %s1143 = scalar_lea.vmem [#allocation2], %s1142
          %1144 = dma.done %s1140, 32
        $region44: #{discriminator_forward.1} parent=39 // pred_fallthru
          _
      $region40: #{discriminator_forward.1} parent=5 // pred_fallthru
        _
    $region6: #{discriminator_forward.1} parent=1 // loop_footer
      %s16 = sadd.s32 1, %s12
    $region7: #{discriminator_forward.1} parent=1 // loop_footer_branch
      %11 = sbr.rel target = $region3
    $region8: #{discriminator_forward.1} parent=1 // loop_exit
      _
    %1145 = vsyncpa [#allocation3], 1
    %s1146 = scalar_lea.sflag [#allocation3], 1
    %1147 = vsyncpa %s1146, 1

</llo_original>
